<compile_context>
chip_gen: v6e
topology: v6e:2x2x1
jax: 0.10.0
libtpu: 0.0.40
codegen_flags: <defaults>
</compile_context>

<pallas_src>
import functools
import math

import jax
import jax.numpy as jnp
from jax.experimental import pallas as pl
from jax.experimental.pallas import tpu as pltpu


def _round_up(x, m):
    return ((x + m - 1) // m) * m


def _fls_fused_kernel(*refs, num_layer):
    """Fused MLP. refs = (x, t, w0x, w0t, b0, w1, b1, ..., w_{L-1}, b_{L-1}, out)."""
    x_ref, t_ref = refs[0], refs[1]
    o_ref = refs[-1]
    p = refs[2:-1]

    w0x_ref, w0t_ref, b0_ref = p[0], p[1], p[2]

    # Layer 0: cat((x, t), -1) @ W0 == x @ W0x + t @ W0t (no concat needed).
    h = jnp.dot(x_ref[...], w0x_ref[...], preferred_element_type=jnp.float32)
    h = h + jnp.dot(t_ref[...], w0t_ref[...], preferred_element_type=jnp.float32)
    h = h + b0_ref[...]
    if num_layer > 1:
        h = jnp.sin(h)  # SinAct after the first Linear

    rest = p[3:]
    for i in range(num_layer - 1):
        w_ref, b_ref = rest[2 * i], rest[2 * i + 1]
        h = jnp.dot(h, w_ref[...], preferred_element_type=jnp.float32) + b_ref[...]
        if i < num_layer - 2:
            h = jnp.tanh(h)  # Tanh on all hidden layers except the final Linear

    o_ref[...] = h.astype(o_ref.dtype)


def fls_forward(params, x, t, *, tile_b=512):
    """Forward pass matching FLS.forward, as ONE fused Pallas kernel call."""
    num_layer = len(params)
    B, x_dim = x.shape
    t_dim = t.shape[1]

    ws = [w for (w, _) in params]
    bs = [b.reshape(1, -1) for (_, b) in params]
    assert ws[0].shape[0] == x_dim + t_dim

    # Lane-dense final output: zero-pad last layer's columns to a multiple of 128.
    out_dim = ws[-1].shape[1]
    out_pad = _round_up(out_dim, 128)
    if out_pad != out_dim:
        ws[-1] = jnp.pad(ws[-1], ((0, 0), (0, out_pad - out_dim)))
        bs[-1] = jnp.pad(bs[-1], ((0, 0), (0, out_pad - out_dim)))

    # Split first layer's weight so the concat becomes two accumulating dots.
    w0x = ws[0][:x_dim]
    w0t = ws[0][x_dim:]

    # Batch tiling: single full block for small B, pipelined batch grid otherwise.
    if B <= tile_b:
        tb = B
        b_pad = B
    else:
        tb = tile_b
        b_pad = _round_up(B, tb)
    if b_pad != B:
        x = jnp.pad(x, ((0, b_pad - B), (0, 0)))
        t = jnp.pad(t, ((0, b_pad - B), (0, 0)))
    grid = (b_pad // tb,)

    inputs = [x, t, w0x, w0t, bs[0]]
    for w, b in zip(ws[1:], bs[1:]):
        inputs += [w, b]

    def _batch_spec(arr):
        return pl.BlockSpec((tb, arr.shape[1]), lambda i: (i, 0))

    def _resident_spec(arr):
        return pl.BlockSpec(arr.shape, lambda i: (0, 0))  # weights stay in VMEM

    in_specs = [_batch_spec(x), _batch_spec(t)] + [_resident_spec(a) for a in inputs[2:]]
    out_specs = pl.BlockSpec((tb, out_pad), lambda i: (i, 0))

    kernel = functools.partial(_fls_fused_kernel, num_layer=num_layer)
    out = pl.pallas_call(
        kernel,
        out_shape=jax.ShapeDtypeStruct((b_pad, out_pad), jnp.float32),
        grid=grid,
        in_specs=in_specs,
        out_specs=out_specs,
        compiler_params=pltpu.CompilerParams(dimension_semantics=("parallel",)),
    )(*inputs)
    return out[:B, :out_dim]


def init_fls_params(key, in_dim, hidden_dim, out_dim, num_layer):
    """Deterministic init mimicking nn.Linear defaults (uniform +-1/sqrt(fan_in))."""
    dims = []
    for i in range(num_layer - 1):
        if i == 0:
            dims.append((in_dim, hidden_dim))
        else:
            dims.append((hidden_dim, hidden_dim))
    dims.append((hidden_dim if num_layer > 1 else in_dim, out_dim))

    params = []
    for (din, dout) in dims:
        key, kw, kb = jax.random.split(key, 3)
        bound = 1.0 / math.sqrt(din)
        w = jax.random.uniform(kw, (din, dout), jnp.float32, -bound, bound)
        b = jax.random.uniform(kb, (dout,), jnp.float32, -bound, bound)
        params.append((w, b))
    return params


def fls_forward_ref(params, x, t):
    """Pure-JAX reference (mirrors the PyTorch module exactly)."""
    h = jnp.concatenate((x, t), axis=-1)
    n = len(params)
    for i, (w, b) in enumerate(params):
        h = h @ w + b
        if i == n - 1:
            pass
        elif i == 0:
            h = jnp.sin(h)
        else:
            h = jnp.tanh(h)
    return h


if __name__ == "__main__":
    # Small shapes consistent with the module: x=(B, 30), t=(B, 2) -> in_dim=32.
    B = 8
    x_dim, t_dim = 30, 2
    in_dim = x_dim + t_dim
    hidden_dim = 32
    out_dim = 4
    num_layer = 4  # Linear+sin, Linear+tanh, Linear+tanh, Linear

    key = jax.random.PRNGKey(0)
    kx, kt, kp = jax.random.split(key, 3)
    x = jax.random.normal(kx, (B, x_dim), jnp.float32)
    t = jax.random.normal(kt, (B, t_dim), jnp.float32)

    params = init_fls_params(kp, in_dim, hidden_dim, out_dim, num_layer)

    fwd = jax.jit(fls_forward)
    out = jax.block_until_ready(fwd(params, x, t))

    ref = fls_forward_ref(params, x, t)
    assert out.shape == (B, out_dim)
    assert jnp.allclose(out, ref, atol=1e-5, rtol=1e-5)

    print("KERNEL_OK")
</pallas_src>

<mosaic_0001>
module attributes {stable_mosaic.version = 11 : i64} {
  func.func @_fls_fused_kernel(%arg0: i32, %arg1: memref<8x30xf32, #tpu.memory_space<vmem>>, %arg2: memref<8x2xf32, #tpu.memory_space<vmem>>, %arg3: memref<30x32xf32, #tpu.memory_space<vmem>>, %arg4: memref<2x32xf32, #tpu.memory_space<vmem>>, %arg5: memref<1x32xf32, #tpu.memory_space<vmem>>, %arg6: memref<32x32xf32, #tpu.memory_space<vmem>>, %arg7: memref<1x32xf32, #tpu.memory_space<vmem>>, %arg8: memref<32x32xf32, #tpu.memory_space<vmem>>, %arg9: memref<1x32xf32, #tpu.memory_space<vmem>>, %arg10: memref<32x128xf32, #tpu.memory_space<vmem>>, %arg11: memref<1x128xf32, #tpu.memory_space<vmem>>, %arg12: memref<8x128xf32, #tpu.memory_space<vmem>>) attributes {dimension_semantics = [#tpu.dimension_semantics<parallel>], iteration_bounds = array<i64: 1>, scalar_prefetch = 0 : i64, scratch_operands = 0 : i64, tpu.core_type = #tpu.core_type<tc>, window_params = [{transform_indices = @transform_0, window_bounds = array<i64: 8, 30>}, {transform_indices = @transform_1, window_bounds = array<i64: 8, 2>}, {pipeline_mode = #tpu.pipeline_mode<synchronous>, transform_indices = @transform_2, window_bounds = array<i64: 30, 32>}, {pipeline_mode = #tpu.pipeline_mode<synchronous>, transform_indices = @transform_3, window_bounds = array<i64: 2, 32>}, {pipeline_mode = #tpu.pipeline_mode<synchronous>, transform_indices = @transform_4, window_bounds = array<i64: 1, 32>}, {pipeline_mode = #tpu.pipeline_mode<synchronous>, transform_indices = @transform_5, window_bounds = array<i64: 32, 32>}, {pipeline_mode = #tpu.pipeline_mode<synchronous>, transform_indices = @transform_6, window_bounds = array<i64: 1, 32>}, {pipeline_mode = #tpu.pipeline_mode<synchronous>, transform_indices = @transform_7, window_bounds = array<i64: 32, 32>}, {pipeline_mode = #tpu.pipeline_mode<synchronous>, transform_indices = @transform_8, window_bounds = array<i64: 1, 32>}, {pipeline_mode = #tpu.pipeline_mode<synchronous>, transform_indices = @transform_9, window_bounds = array<i64: 32, 128>}, {pipeline_mode = #tpu.pipeline_mode<synchronous>, transform_indices = @transform_10, window_bounds = array<i64: 1, 128>}, {transform_indices = @transform_11, window_bounds = array<i64: 8, 128>}]} {
    %c0 = arith.constant 0 : index
    %c0_0 = arith.constant 0 : index
    %0 = vector.load %arg1[%c0, %c0_0] : memref<8x30xf32, #tpu.memory_space<vmem>>, vector<8x30xf32>
    %c0_1 = arith.constant 0 : index
    %c0_2 = arith.constant 0 : index
    %1 = vector.load %arg3[%c0_1, %c0_2] : memref<30x32xf32, #tpu.memory_space<vmem>>, vector<30x32xf32>
    %cst = arith.constant dense<0.000000e+00> : vector<8x32xf32>
    %2 = tpu.matmul %0, %1, %cst {dimension_numbers = #tpu.dot_dimension_numbers<[1], [0], [0], [1], [0, 0, 1, 1], [], []>} : vector<8x30xf32>, vector<30x32xf32>, vector<8x32xf32> -> vector<8x32xf32>
    %c0_3 = arith.constant 0 : index
    %c0_4 = arith.constant 0 : index
    %3 = vector.load %arg2[%c0_3, %c0_4] : memref<8x2xf32, #tpu.memory_space<vmem>>, vector<8x2xf32>
    %c0_5 = arith.constant 0 : index
    %c0_6 = arith.constant 0 : index
    %4 = vector.load %arg4[%c0_5, %c0_6] : memref<2x32xf32, #tpu.memory_space<vmem>>, vector<2x32xf32>
    %cst_7 = arith.constant dense<0.000000e+00> : vector<8x32xf32>
    %5 = tpu.matmul %3, %4, %cst_7 {dimension_numbers = #tpu.dot_dimension_numbers<[1], [0], [0], [1], [0, 0, 1, 1], [], []>} : vector<8x2xf32>, vector<2x32xf32>, vector<8x32xf32> -> vector<8x32xf32>
    %6 = arith.addf %2, %5 : vector<8x32xf32>
    %c0_8 = arith.constant 0 : index
    %c0_9 = arith.constant 0 : index
    %7 = vector.load %arg5[%c0_8, %c0_9] : memref<1x32xf32, #tpu.memory_space<vmem>>, vector<1x32xf32>
    %8 = vector.broadcast %7 : vector<1x32xf32> to vector<8x32xf32>
    %9 = arith.addf %6, %8 : vector<8x32xf32>
    %10 = math.sin %9 : vector<8x32xf32>
    %c0_10 = arith.constant 0 : index
    %c0_11 = arith.constant 0 : index
    %11 = vector.load %arg6[%c0_10, %c0_11] : memref<32x32xf32, #tpu.memory_space<vmem>>, vector<32x32xf32>
    %cst_12 = arith.constant dense<0.000000e+00> : vector<8x32xf32>
    %12 = tpu.matmul %10, %11, %cst_12 {dimension_numbers = #tpu.dot_dimension_numbers<[1], [0], [0], [1], [0, 0, 1, 1], [], []>} : vector<8x32xf32>, vector<32x32xf32>, vector<8x32xf32> -> vector<8x32xf32>
    %c0_13 = arith.constant 0 : index
    %c0_14 = arith.constant 0 : index
    %13 = vector.load %arg7[%c0_13, %c0_14] : memref<1x32xf32, #tpu.memory_space<vmem>>, vector<1x32xf32>
    %14 = vector.broadcast %13 : vector<1x32xf32> to vector<8x32xf32>
    %15 = arith.addf %12, %14 : vector<8x32xf32>
    %16 = math.tanh %15 : vector<8x32xf32>
    %c0_15 = arith.constant 0 : index
    %c0_16 = arith.constant 0 : index
    %17 = vector.load %arg8[%c0_15, %c0_16] : memref<32x32xf32, #tpu.memory_space<vmem>>, vector<32x32xf32>
    %cst_17 = arith.constant dense<0.000000e+00> : vector<8x32xf32>
    %18 = tpu.matmul %16, %17, %cst_17 {dimension_numbers = #tpu.dot_dimension_numbers<[1], [0], [0], [1], [0, 0, 1, 1], [], []>} : vector<8x32xf32>, vector<32x32xf32>, vector<8x32xf32> -> vector<8x32xf32>
    %c0_18 = arith.constant 0 : index
    %c0_19 = arith.constant 0 : index
    %19 = vector.load %arg9[%c0_18, %c0_19] : memref<1x32xf32, #tpu.memory_space<vmem>>, vector<1x32xf32>
    %20 = vector.broadcast %19 : vector<1x32xf32> to vector<8x32xf32>
    %21 = arith.addf %18, %20 : vector<8x32xf32>
    %22 = math.tanh %21 : vector<8x32xf32>
    %c0_20 = arith.constant 0 : index
    %c0_21 = arith.constant 0 : index
    %23 = vector.load %arg10[%c0_20, %c0_21] : memref<32x128xf32, #tpu.memory_space<vmem>>, vector<32x128xf32>
    %cst_22 = arith.constant dense<0.000000e+00> : vector<8x128xf32>
    %24 = tpu.matmul %22, %23, %cst_22 {dimension_numbers = #tpu.dot_dimension_numbers<[1], [0], [0], [1], [0, 0, 1, 1], [], []>} : vector<8x32xf32>, vector<32x128xf32>, vector<8x128xf32> -> vector<8x128xf32>
    %c0_23 = arith.constant 0 : index
    %c0_24 = arith.constant 0 : index
    %25 = vector.load %arg11[%c0_23, %c0_24] : memref<1x128xf32, #tpu.memory_space<vmem>>, vector<1x128xf32>
    %26 = vector.broadcast %25 : vector<1x128xf32> to vector<8x128xf32>
    %27 = arith.addf %24, %26 : vector<8x128xf32>
    %c0_25 = arith.constant 0 : index
    %c0_26 = arith.constant 0 : index
    %28 = vector.load %arg12[%c0_25, %c0_26] : memref<8x128xf32, #tpu.memory_space<vmem>>, vector<8x128xf32>
    tpu.vector_store %arg12[%c0_25, %c0_26], %27 {strides = array<i32>} : memref<8x128xf32, #tpu.memory_space<vmem>>, vector<8x128xf32>,
    return
  }
  func.func @transform_0(%arg0: i32) -> (i32, i32) {
    %c0_i32 = arith.constant 0 : i32
    %c0_i32_0 = arith.constant 0 : i32
    return %arg0, %c0_i32 : i32, i32
  }
  func.func @transform_1(%arg0: i32) -> (i32, i32) {
    %c0_i32 = arith.constant 0 : i32
    %c0_i32_0 = arith.constant 0 : i32
    return %arg0, %c0_i32 : i32, i32
  }
  func.func @transform_2(%arg0: i32) -> (i32, i32) {
    %c0_i32 = arith.constant 0 : i32
    %c0_i32_0 = arith.constant 0 : i32
    %c0_i32_1 = arith.constant 0 : i32
    return %c0_i32, %c0_i32_0 : i32, i32
  }
  func.func @transform_3(%arg0: i32) -> (i32, i32) {
    %c0_i32 = arith.constant 0 : i32
    %c0_i32_0 = arith.constant 0 : i32
    %c0_i32_1 = arith.constant 0 : i32
    return %c0_i32, %c0_i32_0 : i32, i32
  }
  func.func @transform_4(%arg0: i32) -> (i32, i32) {
    %c0_i32 = arith.constant 0 : i32
    %c0_i32_0 = arith.constant 0 : i32
    %c0_i32_1 = arith.constant 0 : i32
    return %c0_i32, %c0_i32_0 : i32, i32
  }
  func.func @transform_5(%arg0: i32) -> (i32, i32) {
    %c0_i32 = arith.constant 0 : i32
    %c0_i32_0 = arith.constant 0 : i32
    %c0_i32_1 = arith.constant 0 : i32
    return %c0_i32, %c0_i32_0 : i32, i32
  }
  func.func @transform_6(%arg0: i32) -> (i32, i32) {
    %c0_i32 = arith.constant 0 : i32
    %c0_i32_0 = arith.constant 0 : i32
    %c0_i32_1 = arith.constant 0 : i32
    return %c0_i32, %c0_i32_0 : i32, i32
  }
  func.func @transform_7(%arg0: i32) -> (i32, i32) {
    %c0_i32 = arith.constant 0 : i32
    %c0_i32_0 = arith.constant 0 : i32
    %c0_i32_1 = arith.constant 0 : i32
    return %c0_i32, %c0_i32_0 : i32, i32
  }
  func.func @transform_8(%arg0: i32) -> (i32, i32) {
    %c0_i32 = arith.constant 0 : i32
    %c0_i32_0 = arith.constant 0 : i32
    %c0_i32_1 = arith.constant 0 : i32
    return %c0_i32, %c0_i32_0 : i32, i32
  }
  func.func @transform_9(%arg0: i32) -> (i32, i32) {
    %c0_i32 = arith.constant 0 : i32
    %c0_i32_0 = arith.constant 0 : i32
    %c0_i32_1 = arith.constant 0 : i32
    return %c0_i32, %c0_i32_0 : i32, i32
  }
  func.func @transform_10(%arg0: i32) -> (i32, i32) {
    %c0_i32 = arith.constant 0 : i32
    %c0_i32_0 = arith.constant 0 : i32
    %c0_i32_1 = arith.constant 0 : i32
    return %c0_i32, %c0_i32_0 : i32, i32
  }
  func.func @transform_11(%arg0: i32) -> (i32, i32) {
    %c0_i32 = arith.constant 0 : i32
    %c0_i32_0 = arith.constant 0 : i32
    return %arg0, %c0_i32 : i32, i32
  }
}

</mosaic_0001>

<llo_original>
// kernel: fls_forward.1
$region0: #{fls_forward.1}
  #allocation0 [shape = 'u32[]', space=smem, size = 0x4, offset = 0x4, fixed_abs, tag = 'smem constant byte address 0x4 - core index']
  #allocation1 [shape = 'u32[144,128]{1,0:T(1,128)}', space=vmem, size = 0x12000, scoped, tag = 'internal scratch']
  %s0 = inlined_call_operand.vmem [shape: f32[8,30], index: 0, kind: input, shape index: {}]
  %s1 = inlined_call_operand.vmem [shape: f32[8,2], index: 1, kind: input, shape index: {}]
  %s2 = inlined_call_operand.vmem [shape: f32[30,32], index: 2, kind: input, shape index: {}]
  %s3 = inlined_call_operand.vmem [shape: f32[2,32], index: 3, kind: input, shape index: {}]
  %s4 = inlined_call_operand.vmem [shape: f32[1,32], index: 4, kind: input, shape index: {}]
  %s5 = inlined_call_operand.vmem [shape: f32[32,32], index: 5, kind: input, shape index: {}]
  %s6 = inlined_call_operand.vmem [shape: f32[1,32], index: 6, kind: input, shape index: {}]
  %s7 = inlined_call_operand.vmem [shape: f32[32,32], index: 7, kind: input, shape index: {}]
  %s8 = inlined_call_operand.vmem [shape: f32[1,32], index: 8, kind: input, shape index: {}]
  %s9 = inlined_call_operand.vmem [shape: f32[32,128], index: 9, kind: input, shape index: {}]
  %s10 = inlined_call_operand.vmem [shape: f32[1,128], index: 10, kind: input, shape index: {}]
  %s11 = inlined_call_operand.vmem [shape: f32[8,128], index: 11, kind: output, shape index: {}]
  %s12 = sld [smem:[#allocation0]]
  $region54: #{fls_forward.1} parent=0
    _
  %s14 = ssub.s32 1, %s12
  %s15 = scalar_select 0, %s14, %s12
  // Predicated region
  $region2: #{fls_forward.1} parent=0 // pred_check
    _
  $region3: #{fls_forward.1} parent=0 // pred_check_branch
    %17 = sbr.rel (0) target = $region5
  $region4: #{fls_forward.1} parent=0 // pred_region
    _
  $region5: #{fls_forward.1} parent=0 // pred_fallthru
    _
  // Predicated region
  $region6: #{fls_forward.1} parent=0 // pred_check
    _
  $region7: #{fls_forward.1} parent=0 // pred_check_branch
    %19 = sbr.rel (0) target = $region9
  $region8: #{fls_forward.1} parent=0 // pred_region
    _
  $region9: #{fls_forward.1} parent=0 // pred_fallthru
    _
  // Predicated region
  $region10: #{fls_forward.1} parent=0 // pred_check
    _
  $region11: #{fls_forward.1} parent=0 // pred_check_branch
    %21 = sbr.rel (0) target = $region13
  $region12: #{fls_forward.1} parent=0 // pred_region
    _
  $region13: #{fls_forward.1} parent=0 // pred_fallthru
    _
  // Predicated region
  $region14: #{fls_forward.1} parent=0 // pred_check
    _
  $region15: #{fls_forward.1} parent=0 // pred_check_branch
    %23 = sbr.rel (0) target = $region17
  $region16: #{fls_forward.1} parent=0 // pred_region
    _
  $region17: #{fls_forward.1} parent=0 // pred_fallthru
    _
  // Predicated region
  $region18: #{fls_forward.1} parent=0 // pred_check
    _
  $region19: #{fls_forward.1} parent=0 // pred_check_branch
    %25 = sbr.rel (0) target = $region21
  $region20: #{fls_forward.1} parent=0 // pred_region
    _
  $region21: #{fls_forward.1} parent=0 // pred_fallthru
    _
  // Predicated region
  $region22: #{fls_forward.1} parent=0 // pred_check
    _
  $region23: #{fls_forward.1} parent=0 // pred_check_branch
    %27 = sbr.rel (0) target = $region25
  $region24: #{fls_forward.1} parent=0 // pred_region
    _
  $region25: #{fls_forward.1} parent=0 // pred_fallthru
    _
  // Predicated region
  $region26: #{fls_forward.1} parent=0 // pred_check
    _
  $region27: #{fls_forward.1} parent=0 // pred_check_branch
    %29 = sbr.rel (0) target = $region29
  $region28: #{fls_forward.1} parent=0 // pred_region
    _
  $region29: #{fls_forward.1} parent=0 // pred_fallthru
    _
  // Predicated region
  $region30: #{fls_forward.1} parent=0 // pred_check
    _
  $region31: #{fls_forward.1} parent=0 // pred_check_branch
    %31 = sbr.rel (0) target = $region33
  $region32: #{fls_forward.1} parent=0 // pred_region
    _
  $region33: #{fls_forward.1} parent=0 // pred_fallthru
    _
  // Predicated region
  $region34: #{fls_forward.1} parent=0 // pred_check
    _
  $region35: #{fls_forward.1} parent=0 // pred_check_branch
    %33 = sbr.rel (0) target = $region37
  $region36: #{fls_forward.1} parent=0 // pred_region
    _
  $region37: #{fls_forward.1} parent=0 // pred_fallthru
    _
  // Predicated region
  $region38: #{fls_forward.1} parent=0 // pred_check
    _
  $region39: #{fls_forward.1} parent=0 // pred_check_branch
    %35 = sbr.rel (0) target = $region41
  $region40: #{fls_forward.1} parent=0 // pred_region
    _
  $region41: #{fls_forward.1} parent=0 // pred_fallthru
    _
  // Predicated region
  $region42: #{fls_forward.1} parent=0 // pred_check
    _
  $region43: #{fls_forward.1} parent=0 // pred_check_branch
    %37 = sbr.rel (0) target = $region45
  $region44: #{fls_forward.1} parent=0 // pred_region
    _
  $region45: #{fls_forward.1} parent=0 // pred_fallthru
    _
  %v38 = vld [vmem:[%s0] sm:$0xff]
  %v39 = vld [vmem:[%s2] sm:$0xff]
  %v40 = vld [vmem:[%s2 + $0x8] sm:$0xff]
  %v41 = vld [vmem:[%s2 + $0x10] sm:$0xff]
  %v42 = vld [vmem:[%s2 + $0x18] sm:$0x3f]
  %v43 = vld [vmem:[%s1] sm:$0xff]
  %v44 = vld [vmem:[%s3] sm:$0x3]
  %vm45 = vcmask 15360
  %v47 = vsel %vm45, %v43, 0
  %vm49 = vcmask 1041408
  %v51 = vsel %vm49, %v44, 0
  %53 = vmatprep.subr.mxu0 0.0
  %54 = vmatpush1.msra.mxu0 0.0
  %55 = vmatprep.subr.mxu0 0.0
  %56 = vmatpush1.msra.mxu0 0.0
  %57 = vmatprep.subr.mxu0 0.0
  %58 = vmatpush1.msra.mxu0 0.0
  %59 = vmatprep.subr.mxu0 0.0
  %60 = vmatpush1.msra.mxu0 0.0
  %61 = vmatprep.subr.mxu0 0.0
  %62 = vmatpush1.msra.mxu0 0.0
  %63 = vmatprep.subr.mxu0 0.0
  %64 = vmatpush1.msra.mxu0 0.0
  %65 = vmatprep.subr.mxu0 0.0
  %66 = vmatpush1.msra.mxu0 0.0
  %67 = vmatprep.subr.mxu0 0.0
  %68 = vmatpush1.msra.mxu0 0.0
  %69 = vmatprep.subr.mxu0 0.0
  %70 = vmatpush1.msra.mxu0 0.0
  %71 = vmatprep.subr.mxu0 0.0
  %72 = vmatpush1.msra.mxu0 0.0
  %73 = vmatprep.subr.mxu0 0.0
  %74 = vmatpush1.msra.mxu0 0.0
  %75 = vmatprep.subr.mxu0 0.0
  %76 = vmatpush1.msra.mxu0 0.0
  %77 = vmatprep.subr.mxu0 0.0
  %78 = vmatpush1.msra.mxu0 0.0
  %79 = vmatprep.subr.mxu0 0.0
  %80 = vmatpush1.msra.mxu0 0.0
  %81 = vmatprep.subr.mxu0 0.0
  %82 = vmatpush1.msra.mxu0 0.0
  %83 = vmatprep.subr.mxu0 0.0
  %84 = vmatpush1.msra.mxu0 %v51
  %85 = vmatprep.subr.mxu0 0.0
  %86 = vmatpush2.msra.mxu0 0.0
  %87 = vmatprep.subr.mxu0 0.0
  %88 = vmatpush2.msra.mxu0 0.0
  %89 = vmatprep.subr.mxu0 0.0
  %90 = vmatpush2.msra.mxu0 0.0
  %91 = vmatprep.subr.mxu0 0.0
  %92 = vmatpush2.msra.mxu0 0.0
  %93 = vmatprep.subr.mxu0 0.0
  %94 = vmatpush2.msra.mxu0 0.0
  %95 = vmatprep.subr.mxu0 0.0
  %96 = vmatpush2.msra.mxu0 0.0
  %97 = vmatprep.subr.mxu0 0.0
  %98 = vmatpush2.msra.mxu0 0.0
  %99 = vmatprep.subr.mxu0 0.0
  %100 = vmatpush2.msra.mxu0 0.0
  %101 = vmatprep.subr.mxu0 0.0
  %102 = vmatpush2.msra.mxu0 0.0
  %103 = vmatprep.subr.mxu0 0.0
  %104 = vmatpush2.msra.mxu0 0.0
  %105 = vmatprep.subr.mxu0 0.0
  %106 = vmatpush2.msra.mxu0 0.0
  %107 = vmatprep.subr.mxu0 0.0
  %108 = vmatpush2.msra.mxu0 0.0
  %109 = vmatprep.subr.mxu0 0.0
  %110 = vmatpush2.msra.mxu0 0.0
  %111 = vmatprep.subr.mxu0 0.0
  %112 = vmatpush2.msra.mxu0 0.0
  %113 = vmatprep.subr.mxu0 0.0
  %114 = vmatpush2.msra.mxu0 0.0
  %115 = vmatprep.subr.mxu0 0.0
  %116 = vmatpush2.msra.mxu0 0.0
  %117 = vmatprep.mubr.f32.mxu0 0.0
  %118 = vmatmul.mubr.f32.gmra.mxu0 %v47
  %v119 = vpop.f32.mrf.mxu0
  %v120 = vadd.f32 0.0, %v119
  %v121 = vpop.f32.mrf.mxu0
  %122 = vdwg.mxu0
  %vm123 = vcmask 244736
  %v125 = vsel %vm123, %v38, 0
  %vm127 = vcmask 1045504
  %v129 = vsel %vm127, %v42, 0
  %131 = vmatprep.subr.mxu0 0.0
  %132 = vmatpush1.msra.mxu0 0.0
  %133 = vmatprep.subr.mxu0 0.0
  %134 = vmatpush1.msra.mxu0 0.0
  %135 = vmatprep.subr.mxu0 0.0
  %136 = vmatpush1.msra.mxu0 0.0
  %137 = vmatprep.subr.mxu0 0.0
  %138 = vmatpush1.msra.mxu0 0.0
  %139 = vmatprep.subr.mxu0 0.0
  %140 = vmatpush1.msra.mxu0 0.0
  %141 = vmatprep.subr.mxu0 0.0
  %142 = vmatpush1.msra.mxu0 0.0
  %143 = vmatprep.subr.mxu0 0.0
  %144 = vmatpush1.msra.mxu0 0.0
  %145 = vmatprep.subr.mxu0 0.0
  %146 = vmatpush1.msra.mxu0 0.0
  %147 = vmatprep.subr.mxu0 0.0
  %148 = vmatpush1.msra.mxu0 0.0
  %149 = vmatprep.subr.mxu0 0.0
  %150 = vmatpush1.msra.mxu0 0.0
  %151 = vmatprep.subr.mxu0 0.0
  %152 = vmatpush1.msra.mxu0 0.0
  %153 = vmatprep.subr.mxu0 0.0
  %154 = vmatpush1.msra.mxu0 0.0
  %155 = vmatprep.subr.mxu0 0.0
  %156 = vmatpush1.msra.mxu0 %v129
  %157 = vmatprep.subr.mxu0 0.0
  %158 = vmatpush1.msra.mxu0 %v41
  %159 = vmatprep.subr.mxu0 0.0
  %160 = vmatpush1.msra.mxu0 %v40
  %161 = vmatprep.subr.mxu0 0.0
  %162 = vmatpush1.msra.mxu0 %v39
  %163 = vmatprep.subr.mxu0 0.0
  %164 = vmatpush2.msra.mxu0 0.0
  %165 = vmatprep.subr.mxu0 0.0
  %166 = vmatpush2.msra.mxu0 0.0
  %167 = vmatprep.subr.mxu0 0.0
  %168 = vmatpush2.msra.mxu0 0.0
  %169 = vmatprep.subr.mxu0 0.0
  %170 = vmatpush2.msra.mxu0 0.0
  %171 = vmatprep.subr.mxu0 0.0
  %172 = vmatpush2.msra.mxu0 0.0
  %173 = vmatprep.subr.mxu0 0.0
  %174 = vmatpush2.msra.mxu0 0.0
  %175 = vmatprep.subr.mxu0 0.0
  %176 = vmatpush2.msra.mxu0 0.0
  %177 = vmatprep.subr.mxu0 0.0
  %178 = vmatpush2.msra.mxu0 0.0
  %179 = vmatprep.subr.mxu0 0.0
  %180 = vmatpush2.msra.mxu0 0.0
  %181 = vmatprep.subr.mxu0 0.0
  %182 = vmatpush2.msra.mxu0 0.0
  %183 = vmatprep.subr.mxu0 0.0
  %184 = vmatpush2.msra.mxu0 0.0
  %185 = vmatprep.subr.mxu0 0.0
  %186 = vmatpush2.msra.mxu0 0.0
  %187 = vmatprep.subr.mxu0 0.0
  %188 = vmatpush2.msra.mxu0 0.0
  %189 = vmatprep.subr.mxu0 0.0
  %190 = vmatpush2.msra.mxu0 0.0
  %191 = vmatprep.subr.mxu0 0.0
  %192 = vmatpush2.msra.mxu0 0.0
  %193 = vmatprep.subr.mxu0 0.0
  %194 = vmatpush2.msra.mxu0 0.0
  %195 = vmatprep.mubr.f32.mxu0 0.0
  %196 = vmatmul.mubr.f32.gmra.mxu0 %v125
  %v197 = vpop.f32.mrf.mxu0
  %v198 = vadd.f32 %v120, %v197
  %v199 = vpop.f32.mrf.mxu0
  %200 = vdwg.mxu0
  %v201 = vld [vmem:[%s4] sm:$0x1]
  %v203 = vlaneseq
  %v204 = vshrl.u32 %v203, 7
  %v205 = vsub.s32 0, %v204
  %v206 = vrot.slane %v201, %v205
  %v208 = vadd.f32 %v198, %v206
  %v209 = vand.u32 2147483647, %v208
  %vm210 = vcmp.le.f32.partialorder %v209, 0.7853982
  %vm211 = vcmp.lt.s32.totalorder %v208, 0
  %v212 = vand.u32 %v208, 2139095040
  %v213 = vshrl.u32 %v212, 23
  %v214 = vsub.s32 %v213, 127
  %v215 = vand.u32 2147483647, %v208
  %v216 = vand.u32 %v215, 8388607
  %v217 = vor.u32 %v216, 8388608
  %v218 = vsub.s32 0, %v217
  %v219 = vadd.s32 %v214, 1
  %vm220 = vcmp.gt.s32.totalorder %v219, 0
  %v221 = vsel %vm220, %v219, 0
  %v222 = vshrl.u32 %v221, 5
  %v223 = vand.u32 %v221, 31
  %v224 = vsub.s32 32, %v223
  %v225 = vshrl.u32 683565275, %v224
  %v226 = vshll.u32 683565275, %v223
  %v227 = vshrl.u32 2475754826, %v224
  %v228 = vor.u32 %v226, %v227
  %v229 = vshll.u32 2475754826, %v223
  %v230 = vshrl.u32 2131351028, %v224
  %v231 = vor.u32 %v229, %v230
  %v232 = vshll.u32 2131351028, %v223
  %v233 = vshrl.u32 2102212464, %v224
  %v234 = vor.u32 %v232, %v233
  %v235 = vshll.u32 2102212464, %v223
  %v236 = vshrl.u32 920167782, %v224
  %v237 = vor.u32 %v235, %v236
  %v238 = vshll.u32 920167782, %v223
  %v239 = vshrl.u32 1326507024, %v224
  %v240 = vor.u32 %v238, %v239
  %vm241 = vcmp.lt.s32.totalorder %v222, 1
  %vm242 = vcmp.lt.s32.totalorder %v222, 2
  %vm243 = vcmp.lt.s32.totalorder %v222, 3
  %vm244 = vcmp.lt.s32.totalorder %v222, 4
  %v245 = vsel %vm241, %v225, %v228
  %v246 = vsel %vm244, %v234, 2102212464
  %v247 = vsel %vm243, %v231, %v246
  %v248 = vsel %vm242, %v245, %v247
  %v249 = vsel %vm241, %v228, %v231
  %v250 = vsel %vm244, %v237, 920167782
  %v251 = vsel %vm243, %v234, %v250
  %v252 = vsel %vm242, %v249, %v251
  %v253 = vsel %vm241, %v231, %v234
  %v254 = vsel %vm244, %v240, 1326507024
  %v255 = vsel %vm243, %v237, %v254
  %v256 = vsel %vm242, %v253, %v255
  %v257 = vshll.u32 %v217, 8
  %v258 = vmul.u32.u64.compose %v257, %v256
  %v259 = vextract.low.u32 %v258
  %v260 = vextract.high.u32 %v258
  %v261 = vmul.u32.u64.compose %v257, %v252
  %v262 = vextract.low.u32 %v261
  %v263 = vextract.high.u32 %v261
  %v264 = vmul.u32 %v257, %v248
  %v265 = vadd.s32 %v260, %v262
  %vm266 = vc.u32 %v260, %v262
  %v267 = vadd.s32 %v263, 1
  %v268 = vsel %vm266, %v267, %v263
  %v269 = vadd.s32 %v264, %v268
  %v270 = vadd.s32 %v269, 536870912
  %v271 = vshrl.u32 %v270, 30
  %v272 = vshll.u32 %v271, 30
  %v273 = vsub.s32 %v269, %v272
  %vm274 = vcmp.lt.s32.totalorder %v273, 0
  %v275 = vsub.s32 0, %v273
  %v276 = vsel %vm274, %v275, %v273
  %v277 = vclz %v276
  %v278 = vsub.s32 %v277, 2
  %vm279 = vcmp.gt.s32.totalorder 0, %v278
  %v280 = vsel %vm279, 0, %v278
  %v281 = vsub.s32 32, %v280
  %v282 = vshll.u32 %v273, %v280
  %v283 = vshrl.u32 %v265, %v281
  %v284 = vor.u32 %v282, %v283
  %v285 = vsub.s32 4294967266, %v280
  %v286 = vadd.s32 %v285, 127
  %v287 = vshll.u32 %v286, 23
  %v288 = vor.u32 4788187, %v287
  %v289 = vand.u32 2147483647, %v288
  %v291 = vcvt.s32.f32 %v284
  %v292 = vmul.f32 %v291, %v289
  %v293 = vxor.u32 %v292, 2147483648
  %v294 = vsel %vm211, %v293, %v292
  %v295 = vsub.s32 4, %v271
  %v296 = vsel %vm211, %v295, %v271
  %v297 = vsel %vm210, %v208, %v294
  %v298 = vsel %vm210, 0, %v296
  %v299 = vcosq.f32.pop %v297
  %v300 = vsinq.f32.pop %v297
  %vm301 = vweird.f32 %v208
  %v302 = vadd.s32 %v298, 3
  %v303 = vand.u32 %v302, 3
  %vm304 = vcmp.lt.s32.totalorder %v303, 2
  %vm305 = vcmp.eq.s32.totalorder %v303, 0
  %v306 = vxor.u32 %v300, 2147483648
  %v307 = vsel %vm305, %v299, %v306
  %vm308 = vcmp.eq.s32.totalorder %v303, 2
  %v309 = vxor.u32 %v299, 2147483648
  %v310 = vsel %vm308, %v309, %v300
  %v311 = vsel %vm304, %v307, %v310
  %v312 = vsel %vm301, nan, %v311
  %v313 = vld [vmem:[%s5] sm:$0xff]
  %v314 = vld [vmem:[%s5 + $0x8] sm:$0xff]
  %v315 = vld [vmem:[%s5 + $0x10] sm:$0xff]
  %v316 = vld [vmem:[%s5 + $0x18] sm:$0xff]
  %v317 = vld [vmem:[%s6] sm:$0x1]
  %v319 = vlaneseq
  %v320 = vshrl.u32 %v319, 7
  %v321 = vsub.s32 0, %v320
  %v322 = vrot.slane %v317, %v321
  %vm324 = vcmask 261120
  %v326 = vsel %vm324, %v312, 0
  %328 = vmatprep.subr.mxu0 0.0
  %329 = vmatpush1.msra.mxu0 0.0
  %330 = vmatprep.subr.mxu0 0.0
  %331 = vmatpush1.msra.mxu0 0.0
  %332 = vmatprep.subr.mxu0 0.0
  %333 = vmatpush1.msra.mxu0 0.0
  %334 = vmatprep.subr.mxu0 0.0
  %335 = vmatpush1.msra.mxu0 0.0
  %336 = vmatprep.subr.mxu0 0.0
  %337 = vmatpush1.msra.mxu0 0.0
  %338 = vmatprep.subr.mxu0 0.0
  %339 = vmatpush1.msra.mxu0 0.0
  %340 = vmatprep.subr.mxu0 0.0
  %341 = vmatpush1.msra.mxu0 0.0
  %342 = vmatprep.subr.mxu0 0.0
  %343 = vmatpush1.msra.mxu0 0.0
  %344 = vmatprep.subr.mxu0 0.0
  %345 = vmatpush1.msra.mxu0 0.0
  %346 = vmatprep.subr.mxu0 0.0
  %347 = vmatpush1.msra.mxu0 0.0
  %348 = vmatprep.subr.mxu0 0.0
  %349 = vmatpush1.msra.mxu0 0.0
  %350 = vmatprep.subr.mxu0 0.0
  %351 = vmatpush1.msra.mxu0 0.0
  %352 = vmatprep.subr.mxu0 0.0
  %353 = vmatpush1.msra.mxu0 %v316
  %354 = vmatprep.subr.mxu0 0.0
  %355 = vmatpush1.msra.mxu0 %v315
  %356 = vmatprep.subr.mxu0 0.0
  %357 = vmatpush1.msra.mxu0 %v314
  %358 = vmatprep.subr.mxu0 0.0
  %359 = vmatpush1.msra.mxu0 %v313
  %360 = vmatprep.subr.mxu0 0.0
  %361 = vmatpush2.msra.mxu0 0.0
  %362 = vmatprep.subr.mxu0 0.0
  %363 = vmatpush2.msra.mxu0 0.0
  %364 = vmatprep.subr.mxu0 0.0
  %365 = vmatpush2.msra.mxu0 0.0
  %366 = vmatprep.subr.mxu0 0.0
  %367 = vmatpush2.msra.mxu0 0.0
  %368 = vmatprep.subr.mxu0 0.0
  %369 = vmatpush2.msra.mxu0 0.0
  %370 = vmatprep.subr.mxu0 0.0
  %371 = vmatpush2.msra.mxu0 0.0
  %372 = vmatprep.subr.mxu0 0.0
  %373 = vmatpush2.msra.mxu0 0.0
  %374 = vmatprep.subr.mxu0 0.0
  %375 = vmatpush2.msra.mxu0 0.0
  %376 = vmatprep.subr.mxu0 0.0
  %377 = vmatpush2.msra.mxu0 0.0
  %378 = vmatprep.subr.mxu0 0.0
  %379 = vmatpush2.msra.mxu0 0.0
  %380 = vmatprep.subr.mxu0 0.0
  %381 = vmatpush2.msra.mxu0 0.0
  %382 = vmatprep.subr.mxu0 0.0
  %383 = vmatpush2.msra.mxu0 0.0
  %384 = vmatprep.subr.mxu0 0.0
  %385 = vmatpush2.msra.mxu0 0.0
  %386 = vmatprep.subr.mxu0 0.0
  %387 = vmatpush2.msra.mxu0 0.0
  %388 = vmatprep.subr.mxu0 0.0
  %389 = vmatpush2.msra.mxu0 0.0
  %390 = vmatprep.subr.mxu0 0.0
  %391 = vmatpush2.msra.mxu0 0.0
  %392 = vmatprep.mubr.f32.mxu0 0.0
  %393 = vmatmul.mubr.f32.gmra.mxu0 %v326
  %v394 = vpop.f32.mrf.mxu0
  %v395 = vadd.f32 %v322, %v394
  %v396 = vpop.f32.mrf.mxu0
  %397 = vdwg.mxu0
  %v398 = vtanh.pop %v395
  %v399 = vld [vmem:[%s7] sm:$0xff]
  %v400 = vld [vmem:[%s7 + $0x8] sm:$0xff]
  %v401 = vld [vmem:[%s7 + $0x10] sm:$0xff]
  %v402 = vld [vmem:[%s7 + $0x18] sm:$0xff]
  %v403 = vld [vmem:[%s8] sm:$0x1]
  %v405 = vlaneseq
  %v406 = vshrl.u32 %v405, 7
  %v407 = vsub.s32 0, %v406
  %v408 = vrot.slane %v403, %v407
  %v411 = vsel %vm324, %v398, 0
  %413 = vmatprep.subr.mxu0 0.0
  %414 = vmatpush1.msra.mxu0 0.0
  %415 = vmatprep.subr.mxu0 0.0
  %416 = vmatpush1.msra.mxu0 0.0
  %417 = vmatprep.subr.mxu0 0.0
  %418 = vmatpush1.msra.mxu0 0.0
  %419 = vmatprep.subr.mxu0 0.0
  %420 = vmatpush1.msra.mxu0 0.0
  %421 = vmatprep.subr.mxu0 0.0
  %422 = vmatpush1.msra.mxu0 0.0
  %423 = vmatprep.subr.mxu0 0.0
  %424 = vmatpush1.msra.mxu0 0.0
  %425 = vmatprep.subr.mxu0 0.0
  %426 = vmatpush1.msra.mxu0 0.0
  %427 = vmatprep.subr.mxu0 0.0
  %428 = vmatpush1.msra.mxu0 0.0
  %429 = vmatprep.subr.mxu0 0.0
  %430 = vmatpush1.msra.mxu0 0.0
  %431 = vmatprep.subr.mxu0 0.0
  %432 = vmatpush1.msra.mxu0 0.0
  %433 = vmatprep.subr.mxu0 0.0
  %434 = vmatpush1.msra.mxu0 0.0
  %435 = vmatprep.subr.mxu0 0.0
  %436 = vmatpush1.msra.mxu0 0.0
  %437 = vmatprep.subr.mxu0 0.0
  %438 = vmatpush1.msra.mxu0 %v402
  %439 = vmatprep.subr.mxu0 0.0
  %440 = vmatpush1.msra.mxu0 %v401
  %441 = vmatprep.subr.mxu0 0.0
  %442 = vmatpush1.msra.mxu0 %v400
  %443 = vmatprep.subr.mxu0 0.0
  %444 = vmatpush1.msra.mxu0 %v399
  %445 = vmatprep.subr.mxu0 0.0
  %446 = vmatpush2.msra.mxu0 0.0
  %447 = vmatprep.subr.mxu0 0.0
  %448 = vmatpush2.msra.mxu0 0.0
  %449 = vmatprep.subr.mxu0 0.0
  %450 = vmatpush2.msra.mxu0 0.0
  %451 = vmatprep.subr.mxu0 0.0
  %452 = vmatpush2.msra.mxu0 0.0
  %453 = vmatprep.subr.mxu0 0.0
  %454 = vmatpush2.msra.mxu0 0.0
  %455 = vmatprep.subr.mxu0 0.0
  %456 = vmatpush2.msra.mxu0 0.0
  %457 = vmatprep.subr.mxu0 0.0
  %458 = vmatpush2.msra.mxu0 0.0
  %459 = vmatprep.subr.mxu0 0.0
  %460 = vmatpush2.msra.mxu0 0.0
  %461 = vmatprep.subr.mxu0 0.0
  %462 = vmatpush2.msra.mxu0 0.0
  %463 = vmatprep.subr.mxu0 0.0
  %464 = vmatpush2.msra.mxu0 0.0
  %465 = vmatprep.subr.mxu0 0.0
  %466 = vmatpush2.msra.mxu0 0.0
  %467 = vmatprep.subr.mxu0 0.0
  %468 = vmatpush2.msra.mxu0 0.0
  %469 = vmatprep.subr.mxu0 0.0
  %470 = vmatpush2.msra.mxu0 0.0
  %471 = vmatprep.subr.mxu0 0.0
  %472 = vmatpush2.msra.mxu0 0.0
  %473 = vmatprep.subr.mxu0 0.0
  %474 = vmatpush2.msra.mxu0 0.0
  %475 = vmatprep.subr.mxu0 0.0
  %476 = vmatpush2.msra.mxu0 0.0
  %477 = vmatprep.mubr.f32.mxu0 0.0
  %478 = vmatmul.mubr.f32.gmra.mxu0 %v411
  %v479 = vpop.f32.mrf.mxu0
  %v480 = vadd.f32 %v408, %v479
  %v481 = vpop.f32.mrf.mxu0
  %482 = vdwg.mxu0
  %v483 = vtanh.pop %v480
  %v484 = vld [vmem:[%s9] sm:$0xff]
  %v485 = vld [vmem:[%s9 + $0x8] sm:$0xff]
  %v486 = vld [vmem:[%s9 + $0x10] sm:$0xff]
  %v487 = vld [vmem:[%s9 + $0x18] sm:$0xff]
  %v488 = vld [vmem:[%s10] sm:$0x1]
  %v490 = vlaneseq
  %v491 = vshrl.u32 %v490, 7
  %v492 = vsub.s32 0, %v491
  %v493 = vrot.slane %v488, %v492
  %v496 = vsel %vm324, %v483, 0
  %498 = vmatprep.subr.mxu0 0.0
  %499 = vmatpush1.msra.mxu0 0.0
  %500 = vmatprep.subr.mxu0 0.0
  %501 = vmatpush1.msra.mxu0 0.0
  %502 = vmatprep.subr.mxu0 0.0
  %503 = vmatpush1.msra.mxu0 0.0
  %504 = vmatprep.subr.mxu0 0.0
  %505 = vmatpush1.msra.mxu0 0.0
  %506 = vmatprep.subr.mxu0 0.0
  %507 = vmatpush1.msra.mxu0 0.0
  %508 = vmatprep.subr.mxu0 0.0
  %509 = vmatpush1.msra.mxu0 0.0
  %510 = vmatprep.subr.mxu0 0.0
  %511 = vmatpush1.msra.mxu0 0.0
  %512 = vmatprep.subr.mxu0 0.0
  %513 = vmatpush1.msra.mxu0 0.0
  %514 = vmatprep.subr.mxu0 0.0
  %515 = vmatpush1.msra.mxu0 0.0
  %516 = vmatprep.subr.mxu0 0.0
  %517 = vmatpush1.msra.mxu0 0.0
  %518 = vmatprep.subr.mxu0 0.0
  %519 = vmatpush1.msra.mxu0 0.0
  %520 = vmatprep.subr.mxu0 0.0
  %521 = vmatpush1.msra.mxu0 0.0
  %522 = vmatprep.subr.mxu0 0.0
  %523 = vmatpush1.msra.mxu0 %v487
  %524 = vmatprep.subr.mxu0 0.0
  %525 = vmatpush1.msra.mxu0 %v486
  %526 = vmatprep.subr.mxu0 0.0
  %527 = vmatpush1.msra.mxu0 %v485
  %528 = vmatprep.subr.mxu0 0.0
  %529 = vmatpush1.msra.mxu0 %v484
  %530 = vmatprep.subr.mxu0 0.0
  %531 = vmatpush2.msra.mxu0 0.0
  %532 = vmatprep.subr.mxu0 0.0
  %533 = vmatpush2.msra.mxu0 0.0
  %534 = vmatprep.subr.mxu0 0.0
  %535 = vmatpush2.msra.mxu0 0.0
  %536 = vmatprep.subr.mxu0 0.0
  %537 = vmatpush2.msra.mxu0 0.0
  %538 = vmatprep.subr.mxu0 0.0
  %539 = vmatpush2.msra.mxu0 0.0
  %540 = vmatprep.subr.mxu0 0.0
  %541 = vmatpush2.msra.mxu0 0.0
  %542 = vmatprep.subr.mxu0 0.0
  %543 = vmatpush2.msra.mxu0 0.0
  %544 = vmatprep.subr.mxu0 0.0
  %545 = vmatpush2.msra.mxu0 0.0
  %546 = vmatprep.subr.mxu0 0.0
  %547 = vmatpush2.msra.mxu0 0.0
  %548 = vmatprep.subr.mxu0 0.0
  %549 = vmatpush2.msra.mxu0 0.0
  %550 = vmatprep.subr.mxu0 0.0
  %551 = vmatpush2.msra.mxu0 0.0
  %552 = vmatprep.subr.mxu0 0.0
  %553 = vmatpush2.msra.mxu0 0.0
  %554 = vmatprep.subr.mxu0 0.0
  %555 = vmatpush2.msra.mxu0 0.0
  %556 = vmatprep.subr.mxu0 0.0
  %557 = vmatpush2.msra.mxu0 0.0
  %558 = vmatprep.subr.mxu0 0.0
  %559 = vmatpush2.msra.mxu0 0.0
  %560 = vmatprep.subr.mxu0 0.0
  %561 = vmatpush2.msra.mxu0 0.0
  %562 = vmatprep.mubr.f32.mxu0 0.0
  %563 = vmatmul.mubr.f32.gmra.mxu0 %v496
  %v564 = vpop.f32.mrf.mxu0
  %v565 = vadd.f32 %v493, %v564
  %v566 = vpop.f32.mrf.mxu0
  %567 = vdwg.mxu0
  %568 = vst [vmem:[%s11] sm:$0xff] %v565
  // Predicated region
  $region46: #{fls_forward.1} parent=0 // pred_check
    _
  $region47: #{fls_forward.1} parent=0 // pred_check_branch
    %570 = sbr.rel (0) target = $region49
  $region48: #{fls_forward.1} parent=0 // pred_region
    _
  $region49: #{fls_forward.1} parent=0 // pred_fallthru
    _
  // Predicated region
  $region50: #{fls_forward.1} parent=0 // pred_check
    _
  $region51: #{fls_forward.1} parent=0 // pred_check_branch
    %572 = sbr.rel (0) target = $region53
  $region52: #{fls_forward.1} parent=0 // pred_region
    _
  $region53: #{fls_forward.1} parent=0 // pred_fallthru
    _

</llo_original>
